<compile_context>
chip_gen: v7x
topology: tpu7x:2x2x1
jax: 0.10.0
libtpu: 0.0.40
codegen_flags: <defaults>
</compile_context>

<pallas_src>
import functools

import jax
import jax.numpy as jnp
import numpy as np
from jax import lax
from jax.experimental import pallas as pl
from jax.experimental.pallas import tpu as pltpu

# Explicit scoped-VMEM limit: mandatory on v5e (default is only 16 MiB),
# safe on v6e (128 MiB physical) and v7x (64 MiB physical, 32 MiB scoped).
_VMEM_LIMIT_BYTES = 32 * 1024 * 1024
# Total bytes the kernel's resident buffers may use (headroom under the limit).
_TOTAL_BUDGET_BYTES = 24 * 1024 * 1024
# Per input buffer target; ~2-6 MiB blocks reach ~85% of HBM roofline.
_PER_BUF_TARGET_BYTES = 6 * 1024 * 1024
# Only force nf >= 2 (for v7x core sharding) if blocks stay >= 1 MiB.
_MIN_SPLIT_BLOCK_BYTES = 1 << 20


def _round_up(x, m):
    return ((x + m - 1) // m) * m


def _round_down(x, m):
    return (x // m) * m


def _choose_tiles(B, F, itemsize):
    """Pick (tile_b, tile_f) from a byte budget rather than a lane cap."""
    f_pad = _round_up(max(F, 1), 128)
    if B * 128 * itemsize <= _PER_BUF_TARGET_BYTES:
        # Whole reduction axis fits in one block: nb == 1.
        tile_b = B
        # per-lane cost: double-buffered input rows + (8, tile_f) f32
        # accumulator + double-buffered (1, tile_f) output block.
        per_lane = 2 * B * itemsize + 8 * 4 + 2 * 4
        tile_f = max(128, _round_down(_TOTAL_BUDGET_BYTES // per_lane, 128))
        tile_f = min(tile_f, f_pad)
    else:
        # Very large batch: tile B on an inner ("arbitrary") grid axis with
        # wide lane strips (16 KiB contiguous rows for f32).
        tile_f = min(f_pad, 4096)
        tile_b = max(8, _round_down(_PER_BUF_TARGET_BYTES // (tile_f * itemsize), 8))
        tile_b = min(tile_b, _round_up(B, 8))
    # Keep >= 2 F tiles when that still yields >= 1 MiB blocks so the
    # "parallel" axis can be split across v7x's two TensorCores (the extra
    # grid step is negligible on single-core v5e/v6e).
    if tile_f >= f_pad and f_pad > 128:
        half = _round_up((f_pad + 1) // 2, 128)
        if tile_b * half * itemsize >= _MIN_SPLIT_BLOCK_BYTES:
            tile_f = half
    return tile_b, tile_f


def _accumulate(x, sumsq_ref, acc_rows):
    """sumsq += x*x with no cross-sublane movement in the hot path."""
    xx = x * x
    tb = x.shape[0]
    if acc_rows == 8:
        # Slices are at sublane-group boundaries (multiples of 8): pure
        # vreg-wise VALU adds into the resident (8, tile_f) accumulator.
        acc = xx[0:8, :]
        for i in range(1, tb // 8):
            acc = acc + xx[i * 8:(i + 1) * 8, :]
        sumsq_ref[...] += acc
    else:
        # tile_b == B and B < 8 (or not a multiple of 8): tiny sublane reduce.
        sumsq_ref[...] += jnp.sum(xx, axis=0, keepdims=True)


def _sparse_kernel(x_ref, o_ref, sumsq_ref, *, B, F, tile_b, tile_f,
                   acc_rows, mask_b, mask_f, reduce_out):
    """Shared body: accumulate sum(x^2) over B; finalize per F tile."""
    fi = pl.program_id(0)
    bi = pl.program_id(1)
    nb = pl.num_programs(1)

    @pl.when(bi == 0)
    def _():
        sumsq_ref[...] = jnp.zeros_like(sumsq_ref)

    x = x_ref[...].astype(jnp.float32)                    # (tile_b, tile_f)

    if mask_b:
        # Only the final B tile is ragged; keep the hot loop mask-free.
        @pl.when(bi == nb - 1)
        def _():
            row = bi * tile_b + lax.broadcasted_iota(jnp.int32, (tile_b, 1), 0)
            _accumulate(jnp.where(row < B, x, 0.0), sumsq_ref, acc_rows)

        @pl.when(bi != nb - 1)
        def _():
            _accumulate(x, sumsq_ref, acc_rows)
    else:
        _accumulate(x, sumsq_ref, acc_rows)

    @pl.when(bi == nb - 1)
    def _():
        if acc_rows == 8:
            sums = jnp.sum(sumsq_ref[...], axis=0, keepdims=True)  # once per F tile
        else:
            sums = sumsq_ref[...]
        norms = jnp.sqrt(sums)                            # (1, tile_f)
        if mask_f:
            # Zero the garbage padded lanes once, BEFORE any cross-lane use.
            col = fi * tile_f + lax.broadcasted_iota(jnp.int32, (1, tile_f), 1)
            norms = jnp.where(col < F, norms, 0.0)
        if reduce_out:
            # One cross-lane (XLU) reduce per F tile -> lane-dense (1,128) partial.
            o_ref[...] = jnp.zeros((1, 128), jnp.float32) + jnp.sum(norms)
        else:
            o_ref[...] = norms.astype(o_ref.dtype)


def sparse_loss(x, reduction="mean"):
    """JAX wrapper matching SparseLoss.forward."""
    x = jnp.asarray(x)
    B = x.shape[0]
    F = int(np.prod(x.shape[1:])) if x.ndim > 1 else 1
    out_dtype = x.dtype if jnp.issubdtype(x.dtype, jnp.floating) else jnp.float32
    xf = x.reshape(B, F)  # free row-major reshape: no pad, no dtype-cast pass

    tile_b, tile_f = _choose_tiles(B, F, xf.dtype.itemsize)
    nf = pl.cdiv(F, tile_f)
    nb = pl.cdiv(B, tile_b)
    mask_f = (F % tile_f) != 0
    mask_b = (B % tile_b) != 0
    acc_rows = 8 if (tile_b >= 8 and tile_b % 8 == 0) else 1
    reduce_out = reduction in ("mean", "sum")

    cparams = pltpu.CompilerParams(
        dimension_semantics=("parallel", "arbitrary"),
        vmem_limit_bytes=_VMEM_LIMIT_BYTES,
    )
    in_spec = pl.BlockSpec((tile_b, tile_f), lambda fi, bi: (bi, fi))
    scratch = [pltpu.VMEM((acc_rows, tile_f), jnp.float32)]
    kernel = functools.partial(
        _sparse_kernel, B=B, F=F, tile_b=tile_b, tile_f=tile_f,
        acc_rows=acc_rows, mask_b=mask_b, mask_f=mask_f, reduce_out=reduce_out)

    if reduce_out:
        parts = pl.pallas_call(
            kernel,
            out_shape=jax.ShapeDtypeStruct((1, nf * 128), jnp.float32),
            grid=(nf, nb),
            in_specs=[in_spec],
            out_specs=pl.BlockSpec((1, 128), lambda fi, bi: (0, fi)),
            scratch_shapes=scratch,
            compiler_params=cparams,
        )(xf)
        total = jnp.sum(parts.reshape(nf, 128)[:, 0])
        if reduction == "mean":
            total = total / F
        return total.astype(out_dtype)
    else:
        norms = pl.pallas_call(
            kernel,
            out_shape=jax.ShapeDtypeStruct((1, nf * tile_f), out_dtype),
            grid=(nf, nb),
            in_specs=[in_spec],
            out_specs=pl.BlockSpec((1, tile_f), lambda fi, bi: (0, fi)),
            scratch_shapes=scratch,
            compiler_params=cparams,
        )(xf)
        return norms[0, :F].reshape(x.shape[1:])


if __name__ == "__main__":
    # Case 1: canonical NCHW activation slab (B=2, C=4, H=W=16).
    x = jax.random.normal(jax.random.PRNGKey(0), (2, 4, 16, 16), dtype=jnp.float32)
    ref_norms = jnp.sqrt(jnp.sum(x.astype(jnp.float32) ** 2, axis=0))

    loss_mean = jax.block_until_ready(sparse_loss(x, reduction="mean"))
    loss_sum = jax.block_until_ready(sparse_loss(x, reduction="sum"))
    norms = jax.block_until_ready(sparse_loss(x, reduction="none"))

    assert np.allclose(np.asarray(loss_mean), np.asarray(jnp.mean(ref_norms)),
                       rtol=1e-5, atol=1e-5)
    assert np.allclose(np.asarray(loss_sum), np.asarray(jnp.sum(ref_norms)),
                       rtol=1e-5, atol=1e-4)
    assert np.allclose(np.asarray(norms), np.asarray(ref_norms),
                       rtol=1e-5, atol=1e-5)

    # Case 2: ragged feature count (exercises the finalize-time lane mask).
    xr = jax.random.normal(jax.random.PRNGKey(1), (2, 3, 5, 7), dtype=jnp.float32)
    rn = jnp.sqrt(jnp.sum(xr ** 2, axis=0))
    r_mean = jax.block_until_ready(sparse_loss(xr, reduction="mean"))
    r_none = jax.block_until_ready(sparse_loss(xr, reduction="none"))
    assert np.allclose(np.asarray(r_mean), np.asarray(jnp.mean(rn)),
                       rtol=1e-5, atol=1e-5)
    assert np.allclose(np.asarray(r_none), np.asarray(rn),
                       rtol=1e-5, atol=1e-5)

    # Case 3: batch that is a multiple of 8 (exercises the (8, tile_f)
    # accumulator / vreg-wise add hot path).
    x8 = jax.random.normal(jax.random.PRNGKey(2), (16, 4, 16, 16), dtype=jnp.float32)
    rn8 = jnp.sqrt(jnp.sum(x8 ** 2, axis=0))
    s8 = jax.block_until_ready(sparse_loss(x8, reduction="sum"))
    n8 = jax.block_until_ready(sparse_loss(x8, reduction="none"))
    assert np.allclose(np.asarray(s8), np.asarray(jnp.sum(rn8)),
                       rtol=1e-5, atol=1e-3)
    assert np.allclose(np.asarray(n8), np.asarray(rn8),
                       rtol=1e-5, atol=1e-5)

    print("KERNEL_OK")
</pallas_src>

<mosaic_0001>
module attributes {stable_mosaic.version = 11 : i64} {
  func.func @_sparse_kernel(%arg0: i32, %arg1: i32, %arg2: memref<2x1024xf32, #tpu.memory_space<vmem>>, %arg3: memref<1x128xf32, #tpu.memory_space<vmem>>, %arg4: memref<1x1024xf32, #tpu.memory_space<vmem>>) attributes {dimension_semantics = [#tpu.dimension_semantics<parallel>, #tpu.dimension_semantics<arbitrary>], iteration_bounds = array<i64: 1, 1>, scalar_prefetch = 0 : i64, scratch_operands = 1 : i64, tpu.core_type = #tpu.core_type<tc>, window_params = [{transform_indices = @transform_0, window_bounds = array<i64: 2, 1024>}, {transform_indices = @transform_1, window_bounds = array<i64: 1, 128>}]} {
    %c0_i32 = arith.constant 0 : i32
    %0 = arith.cmpi eq, %arg1, %c0_i32 : i32
    %1 = arith.extui %0 : i1 to i32
    %c0_i32_0 = arith.constant 0 : i32
    %2 = arith.cmpi ne, %1, %c0_i32_0 : i32
    scf.if %2 {
      %cst_8 = arith.constant 0.000000e+00 : f32
      %13 = vector.broadcast %cst_8 : f32 to vector<1x1024xf32>
      %c0_9 = arith.constant 0 : index
      %c0_10 = arith.constant 0 : index
      %14 = vector.load %arg4[%c0_9, %c0_10] : memref<1x1024xf32, #tpu.memory_space<vmem>>, vector<1x1024xf32>
      tpu.vector_store %arg4[%c0_9, %c0_10], %13 {strides = array<i32>} : memref<1x1024xf32, #tpu.memory_space<vmem>>, vector<1x1024xf32>,
    } else {
    }
    %c0 = arith.constant 0 : index
    %c0_1 = arith.constant 0 : index
    %3 = vector.load %arg2[%c0, %c0_1] : memref<2x1024xf32, #tpu.memory_space<vmem>>, vector<2x1024xf32>
    %4 = arith.mulf %3, %3 : vector<2x1024xf32>
    %c0_2 = arith.constant 0 : index
    %c0_3 = arith.constant 0 : index
    %5 = vector.load %arg4[%c0_2, %c0_3] : memref<1x1024xf32, #tpu.memory_space<vmem>>, vector<1x1024xf32>
    %cst = arith.constant dense<0.000000e+00> : vector<1024xf32>
    %6 = vector.multi_reduction <add>, %4, %cst [0] : vector<2x1024xf32> to vector<1024xf32>
    %7 = vector.shape_cast %6 : vector<1024xf32> to vector<1x1024xf32>
    %8 = arith.addf %5, %7 : vector<1x1024xf32>
    %c0_4 = arith.constant 0 : index
    %c0_5 = arith.constant 0 : index
    %9 = vector.load %arg4[%c0_4, %c0_5] : memref<1x1024xf32, #tpu.memory_space<vmem>>, vector<1x1024xf32>
    tpu.vector_store %arg4[%c0_4, %c0_5], %8 {strides = array<i32>} : memref<1x1024xf32, #tpu.memory_space<vmem>>, vector<1x1024xf32>,
    %c0_i32_6 = arith.constant 0 : i32
    %10 = arith.cmpi eq, %arg1, %c0_i32_6 : i32
    %11 = arith.extui %10 : i1 to i32
    %c0_i32_7 = arith.constant 0 : i32
    %12 = arith.cmpi ne, %11, %c0_i32_7 : i32
    scf.if %12 {
      %c0_8 = arith.constant 0 : index
      %c0_9 = arith.constant 0 : index
      %13 = vector.load %arg4[%c0_8, %c0_9] : memref<1x1024xf32, #tpu.memory_space<vmem>>, vector<1x1024xf32>
      %14 = math.sqrt %13 : vector<1x1024xf32>
      %cst_10 = arith.constant 0.000000e+00 : f32
      %15 = vector.broadcast %cst_10 : f32 to vector<1x128xf32>
      %16 = vector.shape_cast %14 : vector<1x1024xf32> to vector<1x1x1024xf32>
      %cst_11 = arith.constant dense<0.000000e+00> : vector<1xf32>
      %17 = vector.multi_reduction <add>, %16, %cst_11 [1, 2] : vector<1x1x1024xf32> to vector<1xf32>
      %18 = vector.shape_cast %17 : vector<1xf32> to vector<1x1x1xf32>
      %19 = vector.extract %18[0, 0, 0] : f32 from vector<1x1x1xf32>
      %20 = vector.broadcast %19 : f32 to vector<1x128xf32>
      %21 = arith.addf %15, %20 : vector<1x128xf32>
      %c0_12 = arith.constant 0 : index
      %c0_13 = arith.constant 0 : index
      %22 = vector.load %arg3[%c0_12, %c0_13] : memref<1x128xf32, #tpu.memory_space<vmem>>, vector<1x128xf32>
      tpu.vector_store %arg3[%c0_12, %c0_13], %21 {strides = array<i32>} : memref<1x128xf32, #tpu.memory_space<vmem>>, vector<1x128xf32>,
    } else {
    }
    return
  }
  func.func @transform_0(%arg0: i32, %arg1: i32) -> (i32, i32) {
    %c0_i32 = arith.constant 0 : i32
    return %arg1, %arg0 : i32, i32
  }
  func.func @transform_1(%arg0: i32, %arg1: i32) -> (i32, i32) {
    %c0_i32 = arith.constant 0 : i32
    %c0_i32_0 = arith.constant 0 : i32
    return %c0_i32, %arg0 : i32, i32
  }
}

</mosaic_0001>

<llo_original>
// kernel: tpu_custom_call.1
$region0: #{tpu_custom_call.1}
  #allocation0 [shape = 'u32[]', space=smem, size = 0x4, offset = 0x4, fixed_abs, tag = 'smem constant byte address 0x4 - core index']
  #allocation1 [shape = 'u32[144,128]{1,0:T(1,128)}', space=vmem, size = 0x12000, scoped, tag = 'internal scratch']
  #allocation2 [shape = 'f32[1,1024]{1,0:T(1,128)}', space=vmem, size = 0x1000, scoped, tag = 'scratch operand']
  %s0 = inlined_call_operand.hbm [shape: f32[2,1024], index: 0, kind: input, shape index: {}]
  %s1 = inlined_call_operand.hbm [shape: f32[1,128], index: 1, kind: output, shape index: {}]
  %s2 = sld [smem:[#allocation0]]
  $region26: #{tpu_custom_call.1} parent=0
    _
  %s4 = ssub.s32 1, %s2
  %s5 = scalar_select 0, %s4, %s2
  $region1: #{tpu_custom_call.1} parent=0
    #allocation3 [shape = 'u8[8192]{0}', space=vmem, size = 0x2000, scoped, tag = 'input window, operand 0, single buffered']
    #allocation4 [shape = 's32[1]{0}', space=sflag, size = 0x4, scoped, tag = 'scoped memory for tpu_custom_call.1']
    #allocation5 [shape = 's32[1]{0}', space=sflag, size = 0x4, scoped, tag = 'scoped memory for tpu_custom_call.1']
    #allocation6 [shape = 'u8[512]{0}', space=vmem, size = 0x400, scoped, tag = 'output window, operand 0, single buffered']
    %6 = vsyncpa [#allocation4], 0
    %7 = vsyncpa [#allocation5], 0
    // Predicated region
    $region2: #{tpu_custom_call.1} parent=1 // pred_check
      _
    $region3: #{tpu_custom_call.1} parent=1 // pred_check_branch
      %9 = sbr.rel (0) target = $region5
    $region4: #{tpu_custom_call.1} parent=1 // pred_region
      %s11 = ssub.s32 256, 256
      %12 = vsyncadd [#allocation4], %s11
      %s14 = sshll.u32 [#allocation3], 4
      %s15 = int_to_ptr.vmem [resolvable:$true] %s14
      %17 = dma.hbm_to_vmem [thread:$0]  %s0, 256, %s15, [#allocation4]
    $region5: #{tpu_custom_call.1} parent=1 // pred_fallthru
      _
    // Predicated region
    $region6: #{tpu_custom_call.1} parent=1 // pred_check
      _
    $region7: #{tpu_custom_call.1} parent=1 // pred_check_branch
      %19 = sbr.rel (0) target = $region9
    $region8: #{tpu_custom_call.1} parent=1 // pred_region
      %20 = dma.done [#allocation4], 256
    $region9: #{tpu_custom_call.1} parent=1 // pred_fallthru
      _
    %p21 = scmp.eq.s32.totalorder 0, 0
    // Predicated region
    $region10: #{tpu_custom_call.1} parent=1 // pred_check
      %p22 = pneg %p21
    $region11: #{tpu_custom_call.1} parent=1 // pred_check_branch
      %24 = sbr.rel (%p22) target = $region13
    $region12: #{tpu_custom_call.1} parent=1 // pred_region
      %25 = vst [vmem:[#allocation2] sm:$0xff] 0.0
    $region13: #{tpu_custom_call.1} parent=1 // pred_fallthru
      _
    %v26 = vld [vmem:[#allocation3] sm:$0xff]
    %v27 = vld [vmem:[#allocation3 + $0x8] sm:$0xff]
    %v28 = vmul.f32 %v26, %v26
    %v29 = vmul.f32 %v27, %v27
    %v30 = vld [vmem:[#allocation2] sm:$0xff]
    %v33 = vcombine.high %v28, %v28
    %v35 = vunpack.c.l.s4 1983009808
    %v36 = vunpack.c.0.s8 %v35
    %v37 = vlaneseq
    %v38 = vshrl.u32 %v37, 7
    %v39 = vsub.s32 %v36, %v38
    %v40 = vrot.slane %v28, %v39
    %v42 = vunpack.c.l.s4 1983009808
    %v43 = vunpack.c.0.s8 %v42
    %v44 = vlaneseq
    %v45 = vshrl.u32 %v44, 7
    %v46 = vsub.s32 %v43, %v45
    %v47 = vrot.slane %v33, %v46
    %v48 = vcombine.high %v40, %v40
    %v49 = vcombine.high %v47, %v47
    %v50 = vcombine.high %v29, %v29
    %v52 = vunpack.c.l.s4 1983009808
    %v53 = vunpack.c.0.s8 %v52
    %v54 = vlaneseq
    %v55 = vshrl.u32 %v54, 7
    %v56 = vsub.s32 %v53, %v55
    %v57 = vrot.slane %v29, %v56
    %v59 = vunpack.c.l.s4 1983009808
    %v60 = vunpack.c.0.s8 %v59
    %v61 = vlaneseq
    %v62 = vshrl.u32 %v61, 7
    %v63 = vsub.s32 %v60, %v62
    %v64 = vrot.slane %v50, %v63
    %v65 = vcombine.high %v57, %v57
    %v66 = vcombine.high %v64, %v64
    %vm75 = vcmask 1041408
    %v76 = vsel %vm75, %v40, 0.0
    %v77 = vrot.slane %v76, 4
    %v78 = vadd.f32 %v76, %v77
    %v79 = vrot.slane %v78, 2
    %v80 = vadd.f32 %v78, %v79
    %v81 = vrot.slane %v80, 1
    %v82 = vadd.f32 %v80, %v81
    %v83 = vsel %vm75, %v48, 0.0
    %v84 = vrot.slane %v83, 4
    %v85 = vadd.f32 %v83, %v84
    %v86 = vrot.slane %v85, 2
    %v87 = vadd.f32 %v85, %v86
    %v88 = vrot.slane %v87, 1
    %v89 = vadd.f32 %v87, %v88
    %v90 = vsel %vm75, %v47, 0.0
    %v91 = vrot.slane %v90, 4
    %v92 = vadd.f32 %v90, %v91
    %v93 = vrot.slane %v92, 2
    %v94 = vadd.f32 %v92, %v93
    %v95 = vrot.slane %v94, 1
    %v96 = vadd.f32 %v94, %v95
    %v97 = vsel %vm75, %v49, 0.0
    %v98 = vrot.slane %v97, 4
    %v99 = vadd.f32 %v97, %v98
    %v100 = vrot.slane %v99, 2
    %v101 = vadd.f32 %v99, %v100
    %v102 = vrot.slane %v101, 1
    %v103 = vadd.f32 %v101, %v102
    %v104 = vsel %vm75, %v57, 0.0
    %v105 = vrot.slane %v104, 4
    %v106 = vadd.f32 %v104, %v105
    %v107 = vrot.slane %v106, 2
    %v108 = vadd.f32 %v106, %v107
    %v109 = vrot.slane %v108, 1
    %v110 = vadd.f32 %v108, %v109
    %v111 = vsel %vm75, %v65, 0.0
    %v112 = vrot.slane %v111, 4
    %v113 = vadd.f32 %v111, %v112
    %v114 = vrot.slane %v113, 2
    %v115 = vadd.f32 %v113, %v114
    %v116 = vrot.slane %v115, 1
    %v117 = vadd.f32 %v115, %v116
    %v118 = vsel %vm75, %v64, 0.0
    %v119 = vrot.slane %v118, 4
    %v120 = vadd.f32 %v118, %v119
    %v121 = vrot.slane %v120, 2
    %v122 = vadd.f32 %v120, %v121
    %v123 = vrot.slane %v122, 1
    %v124 = vadd.f32 %v122, %v123
    %v125 = vsel %vm75, %v66, 0.0
    %v126 = vrot.slane %v125, 4
    %v127 = vadd.f32 %v125, %v126
    %v128 = vrot.slane %v127, 2
    %v129 = vadd.f32 %v127, %v128
    %v130 = vrot.slane %v129, 1
    %v131 = vadd.f32 %v129, %v130
    %v140 = vcombine.low %v82, %v89
    %v141 = vcombine.low %v96, %v103
    %v142 = vcombine.low %v110, %v117
    %v143 = vcombine.low %v124, %v131
    %v145 = vunpack.c.l.s4 1966171168
    %v146 = vunpack.c.0.s8 %v145
    %v147 = vlaneseq
    %v148 = vshrl.u32 %v147, 7
    %v149 = vsub.s32 %v146, %v148
    %v150 = vrot.slane %v140, %v149
    %v152 = vunpack.c.l.s4 1966171168
    %v153 = vunpack.c.0.s8 %v152
    %v154 = vlaneseq
    %v155 = vshrl.u32 %v154, 7
    %v156 = vsub.s32 %v153, %v155
    %v157 = vrot.slane %v141, %v156
    %v159 = vunpack.c.l.s4 1966171168
    %v160 = vunpack.c.0.s8 %v159
    %v161 = vlaneseq
    %v162 = vshrl.u32 %v161, 7
    %v163 = vsub.s32 %v160, %v162
    %v164 = vrot.slane %v142, %v163
    %v166 = vunpack.c.l.s4 1966171168
    %v167 = vunpack.c.0.s8 %v166
    %v168 = vlaneseq
    %v169 = vshrl.u32 %v168, 7
    %v170 = vsub.s32 %v167, %v169
    %v171 = vrot.slane %v143, %v170
    %v172 = vcombine.low %v150, %v157
    %v173 = vcombine.low %v164, %v171
    %v175 = vunpack.c.l.s4 1966171168
    %v176 = vunpack.c.0.s8 %v175
    %v177 = vlaneseq
    %v178 = vshrl.u32 %v177, 7
    %v179 = vsub.s32 %v176, %v178
    %v180 = vrot.slane %v172, %v179
    %v182 = vunpack.c.l.s4 1966171168
    %v183 = vunpack.c.0.s8 %v182
    %v184 = vlaneseq
    %v185 = vshrl.u32 %v184, 7
    %v186 = vsub.s32 %v183, %v185
    %v187 = vrot.slane %v173, %v186
    %v188 = vcombine.low %v180, %v187
    %v190 = vadd.f32 %v30, %v188
    %191 = vst [vmem:[#allocation2] sm:$0xff] %v190
    // Predicated region
    $region14: #{tpu_custom_call.1} parent=1 // pred_check
      %p192 = pneg %p21
    $region15: #{tpu_custom_call.1} parent=1 // pred_check_branch
      %194 = sbr.rel (%p192) target = $region17
    $region16: #{tpu_custom_call.1} parent=1 // pred_region
      %v195 = vld [vmem:[#allocation2] sm:$0xff]
      %v196 = vrsqrt.pop %v195
      %v197 = vmul.f32 %v195, %v196
      %vm198 = vcmp.eq.f32.partialorder %v195, inf
      %v199 = vsel %vm198, %v195, %v197
      %vm200 = vcmp.eq.f32.partialorder %v195, 0.0
      %v201 = vand.u32 %v195, 2147483648
      %v202 = vsel %vm200, %v201, %v199
      %v204 = vlaneseq
      %v205 = vshrl.u32 %v204, 7
      %v206 = vsub.s32 0, %v205
      %v207 = vrot.slane %v202, %v206
      %v208 = vlaneseq
      %v209 = vshrl.u32 %v208, 7
      %v210 = vsub.s32 1, %v209
      %v211 = vrot.slane %v202, %v210
      %v212 = vlaneseq
      %v213 = vshrl.u32 %v212, 7
      %v214 = vsub.s32 2, %v213
      %v215 = vrot.slane %v202, %v214
      %v216 = vlaneseq
      %v217 = vshrl.u32 %v216, 7
      %v218 = vsub.s32 3, %v217
      %v219 = vrot.slane %v202, %v218
      %v220 = vlaneseq
      %v221 = vshrl.u32 %v220, 7
      %v222 = vsub.s32 4, %v221
      %v223 = vrot.slane %v202, %v222
      %v224 = vlaneseq
      %v225 = vshrl.u32 %v224, 7
      %v226 = vsub.s32 5, %v225
      %v227 = vrot.slane %v202, %v226
      %v228 = vlaneseq
      %v229 = vshrl.u32 %v228, 7
      %v230 = vsub.s32 6, %v229
      %v231 = vrot.slane %v202, %v230
      %v232 = vlaneseq
      %v233 = vshrl.u32 %v232, 7
      %v234 = vsub.s32 7, %v233
      %v235 = vrot.slane %v202, %v234
      %vm244 = vcmask 1040384
      %v245 = vsel %vm244, %v207, 0.0
      %v246 = vsel %vm244, %v211, 0.0
      %v247 = vadd.f32 %v245, %v246
      %v248 = vsel %vm244, %v215, 0.0
      %v249 = vadd.f32 %v247, %v248
      %v250 = vsel %vm244, %v219, 0.0
      %v251 = vadd.f32 %v249, %v250
      %v252 = vsel %vm244, %v223, 0.0
      %v253 = vadd.f32 %v251, %v252
      %v254 = vsel %vm244, %v227, 0.0
      %v255 = vadd.f32 %v253, %v254
      %v256 = vsel %vm244, %v231, 0.0
      %v257 = vadd.f32 %v255, %v256
      %v258 = vsel %vm244, %v235, 0.0
      %v259 = vadd.f32 %v257, %v258
      %260 = vadd.xlane.f32.xlu0 %v259
      %v261 = vpop.xlane.xlu0 %260
      %v262 = vrot.slane %v261, 4
      %v263 = vadd.f32 %v261, %v262
      %v264 = vrot.slane %v263, 2
      %v265 = vadd.f32 %v263, %v264
      %v266 = vrot.slane %v265, 1
      %v267 = vadd.f32 %v265, %v266
      %s268 = vtos %v267
      %v269 = vstv %s268
      %v270 = vadd.f32 %v269, 0.0
      %271 = vst [vmem:[#allocation6] sm:$0x1] %v270
    $region17: #{tpu_custom_call.1} parent=1 // pred_fallthru
      _
    // Predicated region
    $region18: #{tpu_custom_call.1} parent=1 // pred_check
      _
    $region19: #{tpu_custom_call.1} parent=1 // pred_check_branch
      %273 = sbr.rel (0) target = $region21
    $region20: #{tpu_custom_call.1} parent=1 // pred_region
      %s275 = ssub.s32 16, 16
      %276 = vsyncadd [#allocation5], %s275
      %s278 = sshll.u32 [#allocation6], 4
      %s279 = int_to_ptr.vmem [resolvable:$true] %s278
      %281 = dma.vmem_to_hbm [thread:$0]  %s279, 16, %s1, [#allocation5]
    $region21: #{tpu_custom_call.1} parent=1 // pred_fallthru
      _
    // Predicated region
    $region22: #{tpu_custom_call.1} parent=1 // pred_check
      _
    $region23: #{tpu_custom_call.1} parent=1 // pred_check_branch
      %283 = sbr.rel (0) target = $region25
    $region24: #{tpu_custom_call.1} parent=1 // pred_region
      %284 = dma.done [#allocation5], 16
    $region25: #{tpu_custom_call.1} parent=1 // pred_fallthru
      _
    %285 = vsyncpa [#allocation4], 1
    %286 = vsyncpa [#allocation5], 1

</llo_original>
